<compile_context>
chip_gen: v7x
topology: tpu7x:2x2x1
jax: 0.10.0
libtpu: 0.0.40
codegen_flags: <defaults>
</compile_context>

<pallas_src>
import math

import jax
import jax.numpy as jnp
from jax import lax
from jax.experimental import pallas as pl
from jax.experimental.pallas import tpu as pltpu


def _round_up(x, m):
    return ((x + m - 1) // m) * m


def _padded_bytes(shape, itemsize=4):
    """VMEM footprint estimate with (8, 128) minor-dim tiling padding."""
    if len(shape) == 1:
        return _round_up(shape[0] * itemsize, 512)
    lead = 1
    for d in shape[:-2]:
        lead *= d
    return lead * _round_up(shape[-2], 8) * _round_up(shape[-1], 128) * itemsize


def _pick_batch_tile(n, stripe, max_lanes, unroll_cap):
    """Largest divisor of n that (a) keeps the merged lane width within the
    VMEM-driven lane budget, (b) bounds the in-kernel unrolled loops, and
    (c) leaves >= 2 grid steps when n >= 2 (so v7x's two TCs both get work).
    Worst case it degrades to 1 (never to the whole batch)."""
    cap = min(unroll_cap, max(1, max_lanes // max(stripe, 1)))
    if n > 1:
        cap = min(cap, max(1, n // 2))
    best = 1
    for t in range(1, min(n, cap) + 1):
        if n % t == 0:
            best = t
    return best


def _make_kernel(*, b_tile, c_in, c_out, l_in, l_out, k_size, pad, cg,
                 stripe, w_lanes, xm_lanes, with_mask):
    """Fused Conv1d (+ optional length mask) kernel, one batch tile per step."""

    def kernel(*refs):
        if with_mask:
            (lens_ref, x_ref, w_ref, b_ref, o_ref,
             xm_ref, slab_ref, acc_ref) = refs
        else:
            (x_ref, w_ref, b_ref, o_ref,
             xm_ref, slab_ref, acc_ref) = refs
            lens_ref = None

        # ---- Phase 1: merge the natural-layout block into a lane-dense
        # stripe buffer.  Element b owns lanes [b*stripe, (b+1)*stripe); its
        # data sits at [b*stripe + pad, b*stripe + pad + L) and the remaining
        # halo lanes stay zero (zeroed every step -> steps are independent).
        xm_ref[...] = jnp.zeros((c_in, xm_lanes), jnp.float32)
        for b in range(b_tile):
            start = b * stripe + pad
            xm_ref[:, start:start + l_in] = x_ref[b, :, :].astype(jnp.float32)

        # ---- Phase 2: im2col slab (K * cg, w_lanes).  Tap k is simply the
        # stripe buffer shifted by k lanes; the zero halos make boundary
        # handling implicit.  Each tap occupies an 8-aligned row group.
        if cg > c_in:
            zrows = jnp.zeros((cg - c_in, w_lanes), jnp.float32)
        for k in range(k_size):
            part = xm_ref[:, k:k + w_lanes]
            if cg > c_in:
                part = jnp.concatenate([part, zrows], axis=0)
            slab_ref[k * cg:(k + 1) * cg, :] = part

        # ---- Phase 3: one fused MXU contraction + bias epilogue.
        acc_ref[...] = (
            jnp.dot(w_ref[...], slab_ref[...],
                    preferred_element_type=jnp.float32)
            + b_ref[...])

        # ---- Phase 4: scatter per-element (C_out, L_out) chunks back to the
        # natural-layout output block, applying the list_length mask with a
        # scalar fetched from SMEM (scalar prefetch) -- no per-lane len stream.
        i = pl.program_id(0)
        if with_mask:
            pos = lax.broadcasted_iota(jnp.int32, (1, l_out), 1)
        for b in range(b_tile):
            chunk = acc_ref[:, b * stripe:b * stripe + l_out]
            if with_mask:
                valid_len = lens_ref[i * b_tile + b]
                chunk = jnp.where(pos < valid_len, chunk, 0.0)
            o_ref[b, :, :] = chunk.astype(o_ref.dtype)

    return kernel


def one_dim_cnn_small_forward(x, conv_w, conv_b, list_length=None,
                              *, max_lanes=8192, unroll_cap=256):
    """Pallas implementation of OneDimensionalCNNSmall.forward."""
    n, c_in, l_in = x.shape
    c_out, c_in_w, k_size = conv_w.shape
    assert c_in_w == c_in
    pad = (k_size - 1) // 2
    l_out = l_in + 2 * pad - k_size + 1        # == l_in for odd K
    stripe = l_in + 2 * pad                    # per-element lane stripe width
    cg = _round_up(c_in, 8)                    # 8-aligned rows per tap group

    b_tile = _pick_batch_tile(n, stripe, max_lanes, unroll_cap)
    grid = (n // b_tile,)
    w_lanes = b_tile * stripe
    xm_lanes = _round_up(w_lanes + k_size, 128)

    # Weights laid out to match the slab row order: tap-major groups of cg
    # rows, zero-padded channels.  Weights/bias are tiny; this costs nothing.
    wt = jnp.transpose(conv_w.astype(jnp.float32), (0, 2, 1))  # (C_out, K, C_in)
    if cg > c_in:
        wt = jnp.pad(wt, ((0, 0), (0, 0), (0, cg - c_in)))
    w2 = wt.reshape(c_out, k_size * cg)
    b2 = conv_b.astype(jnp.float32).reshape(c_out, 1)

    with_mask = list_length is not None

    in_specs = [
        pl.BlockSpec((b_tile, c_in, l_in), lambda i, *_: (i, 0, 0)),   # x (natural layout)
        pl.BlockSpec((c_out, k_size * cg), lambda i, *_: (0, 0)),      # w2
        pl.BlockSpec((c_out, 1), lambda i, *_: (0, 0)),                # bias
    ]
    out_spec = pl.BlockSpec((b_tile, c_out, l_out), lambda i, *_: (i, 0, 0))
    scratch = [
        pltpu.VMEM((c_in, xm_lanes), jnp.float32),        # stripe buffer
        pltpu.VMEM((k_size * cg, w_lanes), jnp.float32),  # im2col slab
        pltpu.VMEM((c_out, w_lanes), jnp.float32),        # accumulator
    ]

    operands = [x, w2, b2]
    num_prefetch = 0
    if with_mask:
        lens = jnp.asarray(list_length, dtype=jnp.int32).reshape(n)
        operands = [lens] + operands
        num_prefetch = 1

    # VMEM budget (with (8,128) padding) -> scoped-VMEM limit with headroom.
    est = (2 * _padded_bytes((b_tile, c_in, l_in), x.dtype.itemsize)
           + 2 * _padded_bytes((b_tile, c_out, l_out))
           + 2 * _padded_bytes((c_out, k_size * cg))
           + 2 * _padded_bytes((c_out, 1))
           + _padded_bytes((c_in, xm_lanes))
           + _padded_bytes((k_size * cg, w_lanes))
           + _padded_bytes((c_out, w_lanes)))
    vmem_limit = int(min(48 * 2**20, max(32 * 2**20, 2 * est)))

    kernel = _make_kernel(
        b_tile=b_tile, c_in=c_in, c_out=c_out, l_in=l_in, l_out=l_out,
        k_size=k_size, pad=pad, cg=cg, stripe=stripe,
        w_lanes=w_lanes, xm_lanes=xm_lanes, with_mask=with_mask)

    out = pl.pallas_call(
        kernel,
        out_shape=jax.ShapeDtypeStruct((n, c_out, l_out), jnp.float32),
        grid_spec=pltpu.PrefetchScalarGridSpec(
            num_scalar_prefetch=num_prefetch,
            grid=grid,
            in_specs=in_specs,
            out_specs=out_spec,
            scratch_shapes=scratch),
        compiler_params=pltpu.CompilerParams(
            dimension_semantics=("parallel",),
            vmem_limit_bytes=vmem_limit),
        cost_estimate=pl.CostEstimate(
            flops=2 * n * l_out * c_out * k_size * c_in,
            transcendentals=0,
            bytes_accessed=int(x.size * x.dtype.itemsize
                               + 4 * (n * c_out * l_out + w2.size + b2.size))),
    )(*operands)
    return out


def _reference_forward(x, conv_w, conv_b, list_length=None):
    """Pure-JAX reference matching the PyTorch semantics."""
    x = x.astype(jnp.float32)
    k = conv_w.shape[2]
    pad = (k - 1) // 2
    out = lax.conv_general_dilated(
        x, conv_w.astype(jnp.float32),
        window_strides=(1,), padding=[(pad, pad)],
        dimension_numbers=("NCH", "OIH", "NCH"),
    ) + conv_b.astype(jnp.float32)[None, :, None]
    if list_length is not None:
        l_out = out.shape[2]
        col = jnp.arange(l_out)[None, None, :]
        out = jnp.where(col < jnp.asarray(list_length)[:, None, None], out, 0.0)
    return out


if __name__ == "__main__":
    # Module hyperparameters (small shapes).
    in_channels, out_channels, kernel_size = 4, 8, 3
    input_size, feature_size = 16, 32   # feature_size / fc unused in forward
    batch = 2

    key = jax.random.PRNGKey(0)
    kx, kw, kb = jax.random.split(key, 3)

    # Deterministic parameter init (Conv1d-style uniform in +/- 1/sqrt(fan_in)).
    fan_in = in_channels * kernel_size
    bound = 1.0 / math.sqrt(fan_in)
    conv_w = jax.random.uniform(
        kw, (out_channels, in_channels, kernel_size),
        minval=-bound, maxval=bound, dtype=jnp.float32)
    conv_b = jax.random.uniform(
        kb, (out_channels,), minval=-bound, maxval=bound, dtype=jnp.float32)

    x = jax.random.normal(kx, (batch, in_channels, input_size), dtype=jnp.float32)
    list_length = jnp.array([input_size, 10], dtype=jnp.int32)

    out = jax.block_until_ready(
        one_dim_cnn_small_forward(x, conv_w, conv_b, list_length))
    ref = _reference_forward(x, conv_w, conv_b, list_length)
    assert out.shape == (batch, out_channels, input_size)
    assert jnp.allclose(out, ref, atol=1e-5, rtol=1e-5), "masked output mismatch"

    out_nm = jax.block_until_ready(one_dim_cnn_small_forward(x, conv_w, conv_b))
    ref_nm = _reference_forward(x, conv_w, conv_b)
    assert jnp.allclose(out_nm, ref_nm, atol=1e-5, rtol=1e-5), "maskless mismatch"

    # Second case: multi-element tiles and a multi-step grid (batch=12 -> b_tile=6).
    batch2 = 12
    kx2, kl2 = jax.random.split(jax.random.PRNGKey(1), 2)
    x_big = jax.random.normal(kx2, (batch2, in_channels, input_size),
                              dtype=jnp.float32)
    lens_big = jax.random.randint(kl2, (batch2,), 1, input_size + 1,
                                  dtype=jnp.int32)
    out_big = jax.block_until_ready(
        one_dim_cnn_small_forward(x_big, conv_w, conv_b, lens_big))
    ref_big = _reference_forward(x_big, conv_w, conv_b, lens_big)
    assert jnp.allclose(out_big, ref_big, atol=1e-5, rtol=1e-5), "batched mismatch"

    # TODO(synk): relu / maxpool / adaptive_pool / fc exist in __init__ but are
    # never invoked in forward(), so they are intentionally not implemented.
    print("KERNEL_OK")
</pallas_src>

<mosaic_0001>
module attributes {stable_mosaic.version = 11 : i64} {
  func.func @kernel(%arg0: i32, %arg1: memref<2xi32, #tpu.memory_space<smem>>, %arg2: memref<1x4x16xf32, #tpu.memory_space<vmem>>, %arg3: memref<8x24xf32, #tpu.memory_space<vmem>>, %arg4: memref<8x1xf32, #tpu.memory_space<vmem>>, %arg5: memref<1x8x16xf32, #tpu.memory_space<vmem>>, %arg6: memref<4x128xf32, #tpu.memory_space<vmem>>, %arg7: memref<24x18xf32, #tpu.memory_space<vmem>>, %arg8: memref<8x18xf32, #tpu.memory_space<vmem>>) attributes {dimension_semantics = [#tpu.dimension_semantics<parallel>], iteration_bounds = array<i64: 2>, scalar_prefetch = 1 : i64, scratch_operands = 3 : i64, tpu.core_type = #tpu.core_type<tc>, window_params = [{transform_indices = @transform_0, window_bounds = array<i64: 1, 4, 16>}, {pipeline_mode = #tpu.pipeline_mode<synchronous>, transform_indices = @transform_1, window_bounds = array<i64: 8, 24>}, {pipeline_mode = #tpu.pipeline_mode<synchronous>, transform_indices = @transform_2, window_bounds = array<i64: 8, 1>}, {transform_indices = @transform_3, window_bounds = array<i64: 1, 8, 16>}]} {
    %cst = arith.constant 0.000000e+00 : f32
    %0 = vector.broadcast %cst : f32 to vector<4x128xf32>
    %c0 = arith.constant 0 : index
    %c0_0 = arith.constant 0 : index
    %1 = vector.load %arg6[%c0, %c0_0] : memref<4x128xf32, #tpu.memory_space<vmem>>, vector<4x128xf32>
    tpu.vector_store %arg6[%c0, %c0_0], %0 {strides = array<i32>} : memref<4x128xf32, #tpu.memory_space<vmem>>, vector<4x128xf32>,
    %c0_1 = arith.constant 0 : index
    %c0_2 = arith.constant 0 : index
    %c0_3 = arith.constant 0 : index
    %2 = vector.load %arg2[%c0_1, %c0_2, %c0_3] : memref<1x4x16xf32, #tpu.memory_space<vmem>>, vector<1x4x16xf32>
    %3 = vector.shape_cast %2 : vector<1x4x16xf32> to vector<4x16xf32>
    %c0_4 = arith.constant 0 : index
    %c1 = arith.constant 1 : index
    %4 = vector.load %arg6[%c0_4, %c1] : memref<4x128xf32, #tpu.memory_space<vmem>>, vector<4x16xf32>
    tpu.vector_store %arg6[%c0_4, %c1], %3 {strides = array<i32>} : memref<4x128xf32, #tpu.memory_space<vmem>>, vector<4x16xf32>,
    %cst_5 = arith.constant 0.000000e+00 : f32
    %5 = vector.broadcast %cst_5 : f32 to vector<4x18xf32>
    %c0_6 = arith.constant 0 : index
    %c0_7 = arith.constant 0 : index
    %6 = vector.load %arg6[%c0_6, %c0_7] : memref<4x128xf32, #tpu.memory_space<vmem>>, vector<4x18xf32>
    %7 = tpu.concatenate %6, %5 in 0 : vector<4x18xf32>, vector<4x18xf32> -> vector<8x18xf32>
    %c0_8 = arith.constant 0 : index
    %c0_9 = arith.constant 0 : index
    %8 = vector.load %arg7[%c0_8, %c0_9] : memref<24x18xf32, #tpu.memory_space<vmem>>, vector<8x18xf32>
    tpu.vector_store %arg7[%c0_8, %c0_9], %7 {strides = array<i32>} : memref<24x18xf32, #tpu.memory_space<vmem>>, vector<8x18xf32>,
    %c0_10 = arith.constant 0 : index
    %c1_11 = arith.constant 1 : index
    %9 = vector.load %arg6[%c0_10, %c1_11] : memref<4x128xf32, #tpu.memory_space<vmem>>, vector<4x18xf32>
    %10 = tpu.concatenate %9, %5 in 0 : vector<4x18xf32>, vector<4x18xf32> -> vector<8x18xf32>
    %c8 = arith.constant 8 : index
    %c0_12 = arith.constant 0 : index
    %11 = vector.load %arg7[%c8, %c0_12] : memref<24x18xf32, #tpu.memory_space<vmem>>, vector<8x18xf32>
    tpu.vector_store %arg7[%c8, %c0_12], %10 {strides = array<i32>} : memref<24x18xf32, #tpu.memory_space<vmem>>, vector<8x18xf32>,
    %c0_13 = arith.constant 0 : index
    %c2 = arith.constant 2 : index
    %12 = vector.load %arg6[%c0_13, %c2] : memref<4x128xf32, #tpu.memory_space<vmem>>, vector<4x18xf32>
    %13 = tpu.concatenate %12, %5 in 0 : vector<4x18xf32>, vector<4x18xf32> -> vector<8x18xf32>
    %c16 = arith.constant 16 : index
    %c0_14 = arith.constant 0 : index
    %14 = vector.load %arg7[%c16, %c0_14] : memref<24x18xf32, #tpu.memory_space<vmem>>, vector<8x18xf32>
    tpu.vector_store %arg7[%c16, %c0_14], %13 {strides = array<i32>} : memref<24x18xf32, #tpu.memory_space<vmem>>, vector<8x18xf32>,
    %c0_15 = arith.constant 0 : index
    %c0_16 = arith.constant 0 : index
    %15 = vector.load %arg3[%c0_15, %c0_16] : memref<8x24xf32, #tpu.memory_space<vmem>>, vector<8x24xf32>
    %c0_17 = arith.constant 0 : index
    %c0_18 = arith.constant 0 : index
    %16 = vector.load %arg7[%c0_17, %c0_18] : memref<24x18xf32, #tpu.memory_space<vmem>>, vector<24x18xf32>
    %cst_19 = arith.constant dense<0.000000e+00> : vector<8x18xf32>
    %17 = tpu.matmul %15, %16, %cst_19 {dimension_numbers = #tpu.dot_dimension_numbers<[1], [0], [0], [1], [0, 0, 1, 1], [], []>} : vector<8x24xf32>, vector<24x18xf32>, vector<8x18xf32> -> vector<8x18xf32>
    %c0_20 = arith.constant 0 : index
    %c0_21 = arith.constant 0 : index
    %18 = vector.load %arg4[%c0_20, %c0_21] : memref<8x1xf32, #tpu.memory_space<vmem>>, vector<8x1xf32>
    %19 = vector.broadcast %18 : vector<8x1xf32> to vector<8x18xf32>
    %20 = arith.addf %17, %19 : vector<8x18xf32>
    %c0_22 = arith.constant 0 : index
    %c0_23 = arith.constant 0 : index
    %21 = vector.load %arg8[%c0_22, %c0_23] : memref<8x18xf32, #tpu.memory_space<vmem>>, vector<8x18xf32>
    tpu.vector_store %arg8[%c0_22, %c0_23], %20 {strides = array<i32>} : memref<8x18xf32, #tpu.memory_space<vmem>>, vector<8x18xf32>,
    %22 = tpu.iota {dimensions = array<i32: 1>} : vector<1x16xi32>
    %c0_24 = arith.constant 0 : index
    %c0_25 = arith.constant 0 : index
    %23 = vector.load %arg8[%c0_24, %c0_25] : memref<8x18xf32, #tpu.memory_space<vmem>>, vector<8x16xf32>
    %c1_i32 = arith.constant 1 : i32
    %24 = arith.muli %arg0, %c1_i32 : i32
    %c0_i32 = arith.constant 0 : i32
    %25 = arith.addi %24, %c0_i32 : i32
    %26 = arith.index_cast %25 : i32 to index
    %27 = memref.load %arg1[%26] : memref<2xi32, #tpu.memory_space<smem>>
    %28 = vector.broadcast %27 : i32 to vector<1x16xi32>
    %29 = arith.cmpi slt, %22, %28 : vector<1x16xi32>
    %cst_26 = arith.constant 0.000000e+00 : f32
    %30 = vector.shape_cast %29 : vector<1x16xi1> to vector<1x16xi1>
    %31 = vector.broadcast %30 : vector<1x16xi1> to vector<8x16xi1>
    %32 = vector.broadcast %cst_26 : f32 to vector<8x16xf32>
    %33 = arith.select %31, %23, %32 : vector<8x16xi1>, vector<8x16xf32>
    %c0_27 = arith.constant 0 : index
    %c0_28 = arith.constant 0 : index
    %c0_29 = arith.constant 0 : index
    %34 = vector.load %arg5[%c0_27, %c0_28, %c0_29] : memref<1x8x16xf32, #tpu.memory_space<vmem>>, vector<1x8x16xf32>
    %35 = vector.shape_cast %34 : vector<1x8x16xf32> to vector<8x16xf32>
    %36 = vector.shape_cast %33 : vector<8x16xf32> to vector<1x8x16xf32>
    tpu.vector_store %arg5[%c0_27, %c0_28, %c0_29], %36 {strides = array<i32>} : memref<1x8x16xf32, #tpu.memory_space<vmem>>, vector<1x8x16xf32>,
    return
  }
  func.func @transform_0(%arg0: i32, %arg1: memref<2xi32, #tpu.memory_space<smem>>) -> (i32, i32, i32) {
    %c0_i32 = arith.constant 0 : i32
    %c0_i32_0 = arith.constant 0 : i32
    %c0_i32_1 = arith.constant 0 : i32
    return %arg0, %c0_i32, %c0_i32_0 : i32, i32, i32
  }
  func.func @transform_1(%arg0: i32, %arg1: memref<2xi32, #tpu.memory_space<smem>>) -> (i32, i32) {
    %c0_i32 = arith.constant 0 : i32
    %c0_i32_0 = arith.constant 0 : i32
    %c0_i32_1 = arith.constant 0 : i32
    return %c0_i32, %c0_i32_0 : i32, i32
  }
  func.func @transform_2(%arg0: i32, %arg1: memref<2xi32, #tpu.memory_space<smem>>) -> (i32, i32) {
    %c0_i32 = arith.constant 0 : i32
    %c0_i32_0 = arith.constant 0 : i32
    %c0_i32_1 = arith.constant 0 : i32
    return %c0_i32, %c0_i32_0 : i32, i32
  }
  func.func @transform_3(%arg0: i32, %arg1: memref<2xi32, #tpu.memory_space<smem>>) -> (i32, i32, i32) {
    %c0_i32 = arith.constant 0 : i32
    %c0_i32_0 = arith.constant 0 : i32
    %c0_i32_1 = arith.constant 0 : i32
    return %arg0, %c0_i32, %c0_i32_0 : i32, i32, i32
  }
}

</mosaic_0001>

<llo_original>
// kernel: tpu_custom_call.1
$region0: #{tpu_custom_call.1}
  #allocation0 [shape = 'u32[]', space=smem, size = 0x4, offset = 0x4, fixed_abs, tag = 'smem constant byte address 0x4 - core index']
  #allocation1 [shape = 'u32[144,128]{1,0:T(1,128)}', space=vmem, size = 0x12000, scoped, tag = 'internal scratch']
  #allocation2 [shape = 'f32[4,128]{1,0:T(4,128)}', space=vmem, size = 0x800, scoped, tag = 'scratch operand']
  #allocation3 [shape = 'f32[24,18]{1,0:T(8,128)}', space=vmem, size = 0x3000, scoped, tag = 'scratch operand']
  #allocation4 [shape = 'f32[8,18]{1,0:T(8,128)}', space=vmem, size = 0x1000, scoped, tag = 'scratch operand']
  #allocation5 [shape = 's32[1]{0}', space=sflag, size = 0x4, scoped, tag = 'scoped memory for tpu_custom_call.1']
  #allocation6 [shape = 'u8[512]{0}', space=smem, size = 0x200, scoped, tag = 'prefetched SMEM operand 0']
  %s0 = inlined_call_operand.hbm [shape: s32[2], index: 0, kind: input, shape index: {}]
  %s1 = inlined_call_operand.vmem [shape: f32[2,4,16], index: 1, kind: input, shape index: {}]
  %s2 = inlined_call_operand.vmem [shape: f32[8,24], index: 2, kind: input, shape index: {}]
  %s3 = inlined_call_operand.vmem [shape: f32[8,1], index: 3, kind: input, shape index: {}]
  %s4 = inlined_call_operand.hbm [shape: f32[2,8,16], index: 4, kind: output, shape index: {}]
  %s5 = sld [smem:[#allocation0]]
  $region45: #{tpu_custom_call.1} parent=0
    _
  %s7 = ssub.s32 1, %s5
  %s8 = scalar_select 0, %s7, %s5
  %10 = dma.hbm_to_smem %s0, 16, [#allocation6], [#allocation5]
  %11 = dma.done [#allocation5], 16
  %12 = sfence
  $region1: #{tpu_custom_call.1} parent=0
    #allocation7 [shape = 'u8[8192]{0}', space=vmem, size = 0x2000, scoped, tag = 'output window, operand 0']
    #allocation8 [shape = 's32[2]{0}', space=sflag, size = 0x8, scoped, tag = 'scoped memory for tpu_custom_call.1']
    %13 = vsyncpa [#allocation8], 0
    %s14 = scalar_lea.sflag [#allocation8], 1
    %15 = vsyncpa %s14, 0
    loop: start=0, step=1, limit=4
    $region2: #{tpu_custom_call.1} parent=1 // loop_pre_header
      _
    $region3: #{tpu_custom_call.1} parent=1 // loop_header
      %s17 = sphi 0, %s21
      %p18 = scmp.ge.s32.totalorder %s17, 4
      %s27 = sphi 0, %s29
      %s30 = sphi 0, %s27
      %s31 = sphi 0, %s30
      %s47 = sphi 0, %s31
      %s51 = sphi 0, %s51
      %s53 = sphi 0, %s51
      %s54 = sphi 0, %s53
      %s68 = sphi 0, %s54
      %s72 = sphi 0, %s72
      %s74 = sphi 0, %s72
      %s75 = sphi 0, %s74
      %s89 = sphi 0, %s75
      %s95 = sphi 0, %s97
      %s98 = sphi 0, %s95
      %s99 = sphi 0, %s98
      %s115 = sphi 0, %s99
    $region4: #{tpu_custom_call.1} parent=1 // loop_header_branch
      %20 = sbr.rel (%p18) target = $region8
    $region5: #{tpu_custom_call.1} parent=1 // loop_body
      %s22 = ssub.s32 %s17, 1
      %s23 = ssub.s32 %s17, 2
      %s24 = sadd.s32 %s17, 1
      %s25 = ssub.s32 %s17, %s24
      %p26 = scmp.eq.s32.totalorder %s25, 0
      %s28 = sadd.s32 %s27, 1
      %s29 = scalar_select %p26, %s27, %s28
      %p32 = pneg %p26
      %p33 = scmp.eq.s32.totalorder %s17, 1
      %p34 = por %p32, %p33
      %p35 = scmp.ne.s32.totalorder %s27, %s30
      %p36 = scmp.eq.s32.totalorder %s17, 0
      %p37 = por %p35, %p36
      %p38 = scmp.ne.s32.totalorder %s27, %s30
      %p39 = scmp.eq.s32.totalorder %s22, 1
      %p40 = por %p38, %p39
      %p41 = scmp.ne.s32.totalorder %s30, %s31
      %p42 = scmp.eq.s32.totalorder %s22, 0
      %p43 = por %p41, %p42
      %p44 = scmp.ne.s32.totalorder %s30, %s31
      %p45 = scmp.eq.s32.totalorder %s23, 1
      %p46 = por %p44, %p45
      %p48 = scmp.ne.s32.totalorder %s31, %s47
      %p49 = scmp.eq.s32.totalorder %s23, 0
      %p50 = por %p48, %p49
      %s52 = sadd.s32 %s51, 1
      %p55 = scmp.eq.s32.totalorder %s17, 1
      %p56 = scmp.ne.s32.totalorder %s51, %s53
      %p57 = scmp.eq.s32.totalorder %s17, 0
      %p58 = por %p56, %p57
      %p59 = scmp.ne.s32.totalorder %s51, %s53
      %p60 = scmp.eq.s32.totalorder %s22, 1
      %p61 = por %p59, %p60
      %p62 = scmp.ne.s32.totalorder %s53, %s54
      %p63 = scmp.eq.s32.totalorder %s22, 0
      %p64 = por %p62, %p63
      %p65 = scmp.ne.s32.totalorder %s53, %s54
      %p66 = scmp.eq.s32.totalorder %s23, 1
      %p67 = por %p65, %p66
      %p69 = scmp.ne.s32.totalorder %s54, %s68
      %p70 = scmp.eq.s32.totalorder %s23, 0
      %p71 = por %p69, %p70
      %s73 = sadd.s32 %s72, 1
      %p76 = scmp.eq.s32.totalorder %s17, 1
      %p77 = scmp.ne.s32.totalorder %s72, %s74
      %p78 = scmp.eq.s32.totalorder %s17, 0
      %p79 = por %p77, %p78
      %p80 = scmp.ne.s32.totalorder %s72, %s74
      %p81 = scmp.eq.s32.totalorder %s22, 1
      %p82 = por %p80, %p81
      %p83 = scmp.ne.s32.totalorder %s74, %s75
      %p84 = scmp.eq.s32.totalorder %s22, 0
      %p85 = por %p83, %p84
      %p86 = scmp.ne.s32.totalorder %s74, %s75
      %p87 = scmp.eq.s32.totalorder %s23, 1
      %p88 = por %p86, %p87
      %p90 = scmp.ne.s32.totalorder %s75, %s89
      %p91 = scmp.eq.s32.totalorder %s23, 0
      %p92 = por %p90, %p91
      %s93 = ssub.s32 %s17, %s24
      %p94 = scmp.eq.s32.totalorder %s93, 0
      %s96 = sadd.s32 %s95, 1
      %s97 = scalar_select %p94, %s95, %s96
      %p100 = pneg %p94
      %p101 = scmp.eq.s32.totalorder %s17, 1
      %p102 = por %p100, %p101
      %p103 = scmp.ne.s32.totalorder %s95, %s98
      %p104 = scmp.eq.s32.totalorder %s17, 0
      %p105 = por %p103, %p104
      %p106 = scmp.ne.s32.totalorder %s95, %s98
      %p107 = scmp.eq.s32.totalorder %s22, 1
      %p108 = por %p106, %p107
      %p109 = scmp.ne.s32.totalorder %s98, %s99
      %p110 = scmp.eq.s32.totalorder %s22, 0
      %p111 = por %p109, %p110
      %p112 = scmp.ne.s32.totalorder %s98, %s99
      %p113 = scmp.eq.s32.totalorder %s23, 1
      %p114 = por %p112, %p113
      %p116 = scmp.ne.s32.totalorder %s99, %s115
      %p117 = scmp.eq.s32.totalorder %s23, 0
      %p118 = por %p116, %p117
      %p119 = scmp.le.s32.totalorder 1, %s17
      %p120 = scmp.lt.s32.totalorder %s17, 3
      %p121 = pnand %p119, %p120
      %p122 = pneg %p121
      // Predicated region
      $region9: #{tpu_custom_call.1} parent=5 // pred_check
        _
      $region10: #{tpu_custom_call.1} parent=5 // pred_check_branch
        %124 = sbr.rel (%p121) target = $region12
      $region11: #{tpu_custom_call.1} parent=5 // pred_region
        %s125 = ssub.s32 %s17, 1
        // Predicated region
        $region13: #{tpu_custom_call.1} parent=11 // pred_check
          %p126 = pneg %p64
        $region14: #{tpu_custom_call.1} parent=11 // pred_check_branch
          %128 = sbr.rel (%p126) target = $region16
        $region15: #{tpu_custom_call.1} parent=11 // pred_region
          _
        $region16: #{tpu_custom_call.1} parent=11 // pred_fallthru
          _
        // Predicated region
        $region17: #{tpu_custom_call.1} parent=11 // pred_check
          %p129 = pneg %p85
        $region18: #{tpu_custom_call.1} parent=11 // pred_check_branch
          %131 = sbr.rel (%p129) target = $region20
        $region19: #{tpu_custom_call.1} parent=11 // pred_region
          _
        $region20: #{tpu_custom_call.1} parent=11 // pred_fallthru
          _
      $region12: #{tpu_custom_call.1} parent=5 // pred_fallthru
        _
      %p132 = scmp.lt.s32.totalorder %s17, 2
      // Predicated region
      $region21: #{tpu_custom_call.1} parent=5 // pred_check
        %p133 = pneg %p132
      $region22: #{tpu_custom_call.1} parent=5 // pred_check_branch
        %135 = sbr.rel (%p133) target = $region24
      $region23: #{tpu_custom_call.1} parent=5 // pred_region
        // Predicated region
        $region25: #{tpu_custom_call.1} parent=23 // pred_check
          %p136 = pneg %p37
        $region26: #{tpu_custom_call.1} parent=23 // pred_check_branch
          %138 = sbr.rel (%p136) target = $region28
        $region27: #{tpu_custom_call.1} parent=23 // pred_region
          %p139 = scmp.lt.s32.totalorder %s17, 1
          %s140 = scalar_select %p139, %s17, 1
          %s141 = smul.addr %s140, 4
          %s142 = scalar_lea.vmem %s1, %s141
        $region28: #{tpu_custom_call.1} parent=23 // pred_fallthru
          _
      $region24: #{tpu_custom_call.1} parent=5 // pred_fallthru
        _
      %p143 = scmp.le.s32.totalorder 1, %s17
      %p144 = scmp.lt.s32.totalorder %s17, 3
      %p145 = pnand %p143, %p144
      %p146 = pneg %p145
      // Predicated region
      $region29: #{tpu_custom_call.1} parent=5 // pred_check
        _
      $region30: #{tpu_custom_call.1} parent=5 // pred_check_branch
        %148 = sbr.rel (%p145) target = $region32
      $region31: #{tpu_custom_call.1} parent=5 // pred_region
        %s149 = ssub.s32 %s17, 1
        %p150 = scmp.lt.s32.totalorder %s22, 1
        %s151 = scalar_select %p150, %s22, 1
        %s152 = smul.addr %s151, 4
        %s153 = scalar_lea.vmem %s1, %s152
        %p154 = pneg %p43
        %p155 = pneg %p40
        %p156 = pneg %p64
        %p157 = pneg %p61
        %p158 = pneg %p85
        %p159 = pneg %p82
        %p160 = pneg %p111
        %p161 = pneg %p108
        %s162 = sand.u32 %s98, 1
        %s163 = scalar_lea.sflag [#allocation8], %s162
        %s164 = sand.u32 %s98, 1
        %s165 = smul.addr %s164, 8
        %s166 = scalar_lea.vmem [#allocation7], %s165
        %p167 = scmp.lt.s32.totalorder %s22, 1
        %s168 = scalar_select %p167, %s22, 1
        %s169 = smul.addr %s168, 4
        %s170 = scalar_lea.vmem %s1, %s169
        %171 = vst [vmem:[#allocation2] sm:$0xf] 0.0
        %v172 = vld [vmem:[%s170] sm:$0xf]
        %174 = vrot.lane.b32.xlu0 %v172, 1
        %v175 = vpop.permute.xlu0 %174
        %vm177 = vcmask 134152
        %178 = vst.msk [vmem:[#allocation2] sm:$0xf] %vm177, %v175
        %v179 = vld [vmem:[#allocation2] sm:$0xf]
        %vm180 = vcmask 1043456
        %v181 = vsel %vm180, %v179, 0.0
        %vm182 = vcmask 146432
        %183 = vst.msk [vmem:[#allocation3] sm:$0xff] %vm182, %v181
        %v184 = vld [vmem:[#allocation2] sm:$0xf]
        %v185 = vsel %vm180, %v184, 0.0
        %187 = vrot.lane.b32.xlu0 %v185, 127
        %v188 = vpop.permute.xlu0 %187
        %190 = vst.msk [vmem:[#allocation3 + $0x8] sm:$0xff] %vm182, %v188
        %v191 = vld [vmem:[#allocation2] sm:$0xf]
        %v192 = vsel %vm180, %v191, 0.0
        %194 = vrot.lane.b32.xlu0 %v192, 126
        %v195 = vpop.permute.xlu0 %194
        %197 = vst.msk [vmem:[#allocation3 + $0x10] sm:$0xff] %vm182, %v195
        %v198 = vld [vmem:[%s2] sm:$0xff]
        %v199 = vld [vmem:[#allocation3] sm:$0xff]
        %v200 = vld [vmem:[#allocation3 + $0x8] sm:$0xff]
        %v201 = vld [vmem:[#allocation3 + $0x10] sm:$0xff]
        %v202 = vld [vmem:[%s3] sm:$0xff]
        %204 = vset.pattern.permute.xlu0 0
        %205 = vperm.xlu0 %204, %v202
        %v206 = vpop.permute.xlu0 %205
        %vm208 = vcmask 195584
        %v210 = vsel %vm208, %v198, 0
        %212 = vmatprep.subr.mxu0 0.0
        %213 = vmatpush1.msra.mxu0 %v199
        %214 = vmatprep.subr.mxu0 0.0
        %215 = vmatpush1.msra.mxu0 %v200
        %216 = vmatprep.subr.mxu0 0.0
        %217 = vmatpush1.msra.mxu0 %v201
        %218 = vmatprep.subr.mxu0 0.0
        %219 = vmatpush1.msra.mxu0 0.0
        %220 = vmatprep.subr.mxu0 0.0
        %221 = vmatpush1.msra.mxu0 0.0
        %222 = vmatprep.subr.mxu0 0.0
        %223 = vmatpush1.msra.mxu0 0.0
        %224 = vmatprep.subr.mxu0 0.0
        %225 = vmatpush1.msra.mxu0 0.0
        %226 = vmatprep.subr.mxu0 0.0
        %227 = vmatpush1.msra.mxu0 0.0
        %228 = vmatprep.subr.mxu0 0.0
        %229 = vmatpush1.msra.mxu0 0.0
        %230 = vmatprep.subr.mxu0 0.0
        %231 = vmatpush1.msra.mxu0 0.0
        %232 = vmatprep.subr.mxu0 0.0
        %233 = vmatpush1.msra.mxu0 0.0
        %234 = vmatprep.subr.mxu0 0.0
        %235 = vmatpush1.msra.mxu0 0.0
        %236 = vmatprep.subr.mxu0 0.0
        %237 = vmatpush1.msra.mxu0 0.0
        %238 = vmatprep.subr.mxu0 0.0
        %239 = vmatpush1.msra.mxu0 0.0
        %240 = vmatprep.subr.mxu0 0.0
        %241 = vmatpush1.msra.mxu0 0.0
        %242 = vmatprep.subr.mxu0 0.0
        %243 = vmatpush1.msra.mxu0 0.0
        %244 = vmatprep.subr.mxu0 0.0
        %245 = vmatpush1.msra.mxu0 0.0
        %246 = vmatprep.subr.mxu0 0.0
        %247 = vmatpush1.msra.mxu0 0.0
        %248 = vmatprep.subr.mxu0 0.0
        %249 = vmatpush1.msra.mxu0 0.0
        %250 = vmatprep.subr.mxu0 0.0
        %251 = vmatpush1.msra.mxu0 0.0
        %252 = vmatprep.subr.mxu0 0.0
        %253 = vmatpush1.msra.mxu0 0.0
        %254 = vmatprep.subr.mxu0 0.0
        %255 = vmatpush1.msra.mxu0 0.0
        %256 = vmatprep.subr.mxu0 0.0
        %257 = vmatpush1.msra.mxu0 0.0
        %258 = vmatprep.subr.mxu0 0.0
        %259 = vmatpush1.msra.mxu0 0.0
        %260 = vmatprep.subr.mxu0 0.0
        %261 = vmatpush1.msra.mxu0 0.0
        %262 = vmatprep.subr.mxu0 0.0
        %263 = vmatpush1.msra.mxu0 0.0
        %264 = vmatprep.subr.mxu0 0.0
        %265 = vmatpush1.msra.mxu0 0.0
        %266 = vmatprep.subr.mxu0 0.0
        %267 = vmatpush1.msra.mxu0 0.0
        %268 = vmatprep.subr.mxu0 0.0
        %269 = vmatpush1.msra.mxu0 0.0
        %270 = vmatprep.subr.mxu0 0.0
        %271 = vmatpush1.msra.mxu0 0.0
        %272 = vmatprep.subr.mxu0 0.0
        %273 = vmatpush1.msra.mxu0 0.0
        %274 = vmatprep.subr.mxu0 0.0
        %275 = vmatpush1.msra.mxu0 0.0
        %276 = vmatprep.mubr.f32.mxu0 0.0
        %277 = vmatmul.mubr.f32.gmra.mrb[0].mxu0 %v210
        %v278 = vpop.f32.mrb[0].mxu0
        %v279 = vadd.f32 %v206, %v278
        %v280 = vpop.f32.mrb[0].mxu0
        %281 = vdwg.mxu0
        %282 = vst.msk [vmem:[#allocation4] sm:$0xff] %vm182, %v279
        %v283 = vlaneseq
        %v284 = vand.u32 %v283, 127
        %v285 = vld [vmem:[#allocation4] sm:$0xff]
        %s286 = sld [smem:[#allocation6 + %s22]]
        %v287 = vstv %s286
        %vm288 = vcmp.lt.s32.totalorder %v284, %v287
        %v289 = vsel %vm288, 1, 0
        %vm290 = vcmp.eq.s32.totalorder %v289, 1
        %v291 = vsel %vm290, %v285, 0.0
        %vm292 = vcmask 130048
        %293 = vst.msk [vmem:[%s166] sm:$0xff] %vm292, %v291
        %s294 = sand.u32 %s98, 1
        %s295 = scalar_lea.sflag [#allocation8], %s294
        %s296 = sand.u32 %s98, 1
        %s297 = smul.addr %s296, 8
        %s298 = scalar_lea.vmem [#allocation7], %s297
        // Predicated region
        $region33: #{tpu_custom_call.1} parent=31 // pred_check
          %p299 = pneg %p108
        $region34: #{tpu_custom_call.1} parent=31 // pred_check_branch
          %301 = sbr.rel (%p299) target = $region36
        $region35: #{tpu_custom_call.1} parent=31 // pred_region
          %s303 = ssub.s32 128, 128
          %304 = vsyncadd %s295, %s303
          %s305 = smul.addr %s22, 128
          %s306 = scalar_lea.hbm %s4, %s305
          %s308 = sshll.u32 %s298, 4
          %s309 = int_to_ptr.vmem [resolvable:$true] %s308
          %311 = dma.vmem_to_hbm [thread:$0]  %s309, 128, %s306, %s295
        $region36: #{tpu_custom_call.1} parent=31 // pred_fallthru
          _
      $region32: #{tpu_custom_call.1} parent=5 // pred_fallthru
        _
      %p312 = scmp.le.s32.totalorder 2, %s17
      // Predicated region
      $region37: #{tpu_custom_call.1} parent=5 // pred_check
        %p313 = pneg %p312
      $region38: #{tpu_custom_call.1} parent=5 // pred_check_branch
        %315 = sbr.rel (%p313) target = $region40
      $region39: #{tpu_custom_call.1} parent=5 // pred_region
        %s316 = ssub.s32 %s17, 2
        // Predicated region
        $region41: #{tpu_custom_call.1} parent=39 // pred_check
          %p317 = pneg %p114
        $region42: #{tpu_custom_call.1} parent=39 // pred_check_branch
          %319 = sbr.rel (%p317) target = $region44
        $region43: #{tpu_custom_call.1} parent=39 // pred_region
          %s320 = sand.u32 %s99, 1
          %s321 = scalar_lea.sflag [#allocation8], %s320
          %s322 = sand.u32 %s99, 1
          %s323 = smul.addr %s322, 8
          %s324 = scalar_lea.vmem [#allocation7], %s323
          %325 = dma.done %s321, 128
        $region44: #{tpu_custom_call.1} parent=39 // pred_fallthru
          _
      $region40: #{tpu_custom_call.1} parent=5 // pred_fallthru
        _
    $region6: #{tpu_custom_call.1} parent=1 // loop_footer
      %s21 = sadd.s32 1, %s17
    $region7: #{tpu_custom_call.1} parent=1 // loop_footer_branch
      %16 = sbr.rel target = $region3
    $region8: #{tpu_custom_call.1} parent=1 // loop_exit
      _
    %326 = vsyncpa [#allocation8], 1
    %s327 = scalar_lea.sflag [#allocation8], 1
    %328 = vsyncpa %s327, 1

</llo_original>
